<compile_context>
chip_gen: v7x
topology: tpu7x:2x2x1
jax: 0.10.0
libtpu: 0.0.40
codegen_flags: <defaults>
</compile_context>

<pallas_src>
import functools

import jax
import jax.numpy as jnp
from jax.experimental import pallas as pl
from jax.experimental.pallas import tpu as pltpu


# ----------------------------------------------------------------------------
# Shared per-tile math
# ----------------------------------------------------------------------------
def _tile_core(logits, tmask, at, valid, gamma):
    """Focal + CAGCN contributions for one (tm, c) tile.

    logits : (tm, c) float32
    tmask  : (tm, c) bool    -- True at the target class (one slot per row)
    at     : (tm, 1) float32 -- alpha[target]
    valid  : (tm, 1) bool    -- masks rows past N in the last tile
    returns (focal_sum, contrib_sum) float32 scalars
    """
    # softmax pieces along classes, computed once and reused
    m = jnp.max(logits, axis=1, keepdims=True)          # (tm, 1)
    z = logits - m                                       # (tm, c)
    ez = jnp.exp(z)                                      # (tm, c)  single EUP pass
    sumexp = jnp.sum(ez, axis=1, keepdims=True)          # (tm, 1)
    lse = jnp.log(sumexp)                                # (tm, 1)

    # ---- FocalLoss(gamma, alpha): log_softmax gathered at the target -------
    zt = jnp.sum(jnp.where(tmask, z, 0.0), axis=1, keepdims=True)
    logpt = zt - lse
    pt = jnp.exp(logpt)
    if gamma == 2:
        om = 1.0 - pt
        focal = -(om * om) * (logpt * at)
    else:
        focal = -((1.0 - pt) ** int(gamma)) * (logpt * at)
    focal = jnp.where(valid, focal, 0.0)                 # NaN-safe row masking

    # ---- CAGCN: top-1 / top-2 of softmax without materializing probs -------
    #   p_max   = exp(max(z) - lse) = 1 / sumexp
    #   correct <=> target attains the row max  <=> zt == 0   (tie caveat)
    #   second  = largest exp(z) with max slot(s) masked to 0
    inv_sum = 1.0 / sumexp
    p_max = inv_sum
    correct = zt == 0.0
    second = jnp.max(jnp.where(z == 0.0, 0.0, ez), axis=1, keepdims=True) * inv_sum
    contrib = jnp.where(correct, 1.0 - p_max + second, p_max - second)
    contrib = jnp.where(valid, contrib, 0.0)

    return jnp.sum(focal), jnp.sum(contrib)


def _write_partials(out_ref, focal_sum, contrib_sum):
    # lane-dense (1, 8, 128) per-tile partial: lane 0 = focal, lane 1 = contrib
    lane = jax.lax.broadcasted_iota(jnp.int32, (1, 8, 128), 2)
    out_ref[...] = jnp.where(lane == 0, focal_sum,
                             jnp.where(lane == 1, contrib_sum, 0.0))


# ----------------------------------------------------------------------------
# Kernels
# ----------------------------------------------------------------------------
def _posttrain_kernel_int(logits_ref, side_ref, out_ref, *, tm, c, n, gamma):
    """Integer-label path: side = (tm, 2) float32 [label, alpha[label]]."""
    pid = pl.program_id(0)
    logits = logits_ref[...].astype(jnp.float32)         # (tm, c)
    side = side_ref[...].astype(jnp.float32)             # (tm, 2)
    label = side[:, 0:1].astype(jnp.int32)                # exact for class ids
    at = side[:, 1:2]

    row = pid * tm + jax.lax.broadcasted_iota(jnp.int32, (tm, 1), 0)
    valid = row < n
    col = jax.lax.broadcasted_iota(jnp.int32, (tm, c), 1)  # only (tm,c) iota
    tmask = col == label

    focal_sum, contrib_sum = _tile_core(logits, tmask, at, valid, gamma)
    _write_partials(out_ref, focal_sum, contrib_sum)


def _posttrain_kernel_onehot(logits_ref, gt_ref, alpha_ref, out_ref, *,
                             tm, c, n, gamma):
    """One-hot gt path: argmax(gt) + alpha gather fused into the kernel."""
    pid = pl.program_id(0)
    logits = logits_ref[...].astype(jnp.float32)          # (tm, c)
    gt = gt_ref[...].astype(jnp.float32)                  # (tm, c)
    alpha = alpha_ref[...].astype(jnp.float32)            # (1, c)

    row = pid * tm + jax.lax.broadcasted_iota(jnp.int32, (tm, 1), 0)
    valid = row < n

    # one-hot (or single-maximum) labels: the row max marks the target slot
    gt_max = jnp.max(gt, axis=1, keepdims=True)
    tmask = gt == gt_max
    at = jnp.sum(jnp.where(tmask, alpha, 0.0), axis=1, keepdims=True)

    focal_sum, contrib_sum = _tile_core(logits, tmask, at, valid, gamma)
    _write_partials(out_ref, focal_sum, contrib_sum)


# ----------------------------------------------------------------------------
# Tiling / wrapper
# ----------------------------------------------------------------------------
def _pick_tm(n, c, streamed_row_bytes, *, sublane, extra_row_bytes=0,
             budget_bytes=2 * 1024 * 1024):
    """Byte-budget-driven row tile (~1-2 MiB working set per grid step).

    streamed_row_bytes: HBM bytes per row of all streamed (tm, c) inputs.
    extra_row_bytes:    per-row VMEM for lane-padded side tiles + f32 temps.
    """
    per_row = max(streamed_row_bytes + extra_row_bytes, 1)
    tm = max(sublane, (budget_bytes // per_row) // sublane * sublane)
    if n <= sublane:
        return n                       # single full block (always legal)
    # v7x megacore: keep >= 2 tiles on the "parallel" batch axis when possible
    half = -(-n // 2)
    half = -(-half // sublane) * sublane
    return min(tm, max(half, sublane))


def posttrain_loss(logits, gt_label, prob_dist, shrinkage_factor, gamma=2,
                   budget_bytes=2 * 1024 * 1024):
    """FocalLoss(gamma, alpha=normalize(1/(prob_dist+1e-6))) + shrink*CAGCN.

    gt_label may be (N,) integer class ids (cheapest: no (N,C) gt traffic) or
    (N, C) one-hot labels (argmax + alpha gather are fused into the kernel).
    """
    n, c = logits.shape

    # alpha: tiny (C,) computation, stays in XLA
    recip = 1.0 / (prob_dist.astype(jnp.float32) + 1e-6)
    alpha = recip / jnp.sum(jnp.abs(recip))

    vmem_limit = 32 * 1024 * 1024
    out_block = pl.BlockSpec((1, 8, 128), lambda i: (i, 0, 0))

    if gt_label.ndim == 1:
        # ---- integer labels: one merged (N, 2) side input -------------------
        labels = gt_label.astype(jnp.int32)
        at = alpha[labels]
        side = jnp.stack([labels.astype(jnp.float32), at], axis=1)   # (N, 2)

        itemsize = jnp.dtype(logits.dtype).itemsize
        sublane = 16 if itemsize < 4 else 8
        streamed = itemsize * c + 2 * 4
        extra = 128 * 4 + 4 * c        # lane-padded (tm,128) side + f32 temp
        tm = _pick_tm(n, c, streamed, sublane=sublane, extra_row_bytes=extra,
                      budget_bytes=budget_bytes)
        num_tiles = pl.cdiv(n, tm)

        kernel = functools.partial(_posttrain_kernel_int,
                                   tm=tm, c=c, n=n, gamma=int(gamma))
        partials = pl.pallas_call(
            kernel,
            out_shape=jax.ShapeDtypeStruct((num_tiles, 8, 128), jnp.float32),
            grid_spec=pltpu.PrefetchScalarGridSpec(
                num_scalar_prefetch=0,
                grid=(num_tiles,),
                in_specs=[
                    pl.BlockSpec((tm, c), lambda i: (i, 0)),   # logits tile
                    pl.BlockSpec((tm, 2), lambda i: (i, 0)),   # [label, at]
                ],
                out_specs=out_block,
            ),
            compiler_params=pltpu.CompilerParams(
                dimension_semantics=("parallel",),
                vmem_limit_bytes=vmem_limit),
        )(logits, side)
    else:
        # ---- one-hot gt: fused argmax + alpha gather (gt read exactly once) -
        alpha_row = alpha.reshape(1, c)
        itemsize_l = jnp.dtype(logits.dtype).itemsize
        itemsize_g = jnp.dtype(gt_label.dtype).itemsize
        sublane = 16 if min(itemsize_l, itemsize_g) < 4 else 8
        streamed = (itemsize_l + itemsize_g) * c
        extra = 4 * c                  # f32 working-tile proxy
        tm = _pick_tm(n, c, streamed, sublane=sublane, extra_row_bytes=extra,
                      budget_bytes=budget_bytes)
        num_tiles = pl.cdiv(n, tm)

        kernel = functools.partial(_posttrain_kernel_onehot,
                                   tm=tm, c=c, n=n, gamma=int(gamma))
        partials = pl.pallas_call(
            kernel,
            out_shape=jax.ShapeDtypeStruct((num_tiles, 8, 128), jnp.float32),
            grid_spec=pltpu.PrefetchScalarGridSpec(
                num_scalar_prefetch=0,
                grid=(num_tiles,),
                in_specs=[
                    pl.BlockSpec((tm, c), lambda i: (i, 0)),   # logits tile
                    pl.BlockSpec((tm, c), lambda i: (i, 0)),   # gt tile
                    pl.BlockSpec((1, c), lambda i: (0, 0)),    # alpha row
                ],
                out_specs=out_block,
            ),
            compiler_params=pltpu.CompilerParams(
                dimension_semantics=("parallel",),
                vmem_limit_bytes=vmem_limit),
        )(logits, gt_label, alpha_row)

    focal_sum = jnp.sum(partials[:, 0, 0])
    contrib_sum = jnp.sum(partials[:, 0, 1])
    main_loss = focal_sum / n                       # FocalLoss .mean()
    aux_loss = contrib_sum / (c * n)                # CAGCN: /num_classes /len
    return main_loss + shrinkage_factor * aux_loss


# ----------------------------------------------------------------------------
# Pure-JAX reference mirroring the PyTorch forward
# ----------------------------------------------------------------------------
def _reference(logits, gt_label, prob_dist, shrinkage_factor, gamma=2):
    n, c = logits.shape
    recip = 1.0 / (prob_dist.astype(jnp.float32) + 1e-6)
    alpha = recip / jnp.sum(jnp.abs(recip))

    logp = jax.nn.log_softmax(logits.astype(jnp.float32), axis=1)
    probs = jnp.exp(logp)
    tgt = jnp.argmax(gt_label, axis=-1)
    pred = jnp.argmax(probs, axis=-1)

    logpt = jnp.take_along_axis(logp, tgt[:, None], axis=1)[:, 0]
    pt = jnp.exp(logpt)
    at = alpha[tgt]
    main = jnp.mean(-((1.0 - pt) ** gamma) * (logpt * at))

    top2 = jax.lax.top_k(probs, 2)[0]
    largest, second = top2[:, 0], top2[:, 1]
    correct = pred == tgt
    contrib = jnp.where(correct, 1.0 - largest + second, largest - second)
    aux = jnp.sum(contrib) / c / n
    return main + shrinkage_factor * aux


if __name__ == "__main__":
    key = jax.random.PRNGKey(0)
    k1, k2, k3, k4, k5, k6, k7 = jax.random.split(key, 7)
    shrinkage_factor = 0.5
    C = 32
    prob_dist = jax.random.uniform(k3, (C,), dtype=jnp.float32,
                                   minval=0.1, maxval=1.0)

    # ---- test 1: one-hot gt path, single tile, under jit --------------------
    N = 8
    logits = jax.random.normal(k1, (N, C), dtype=jnp.float32)
    labels = jax.random.randint(k2, (N,), 0, C)
    gt_label = jax.nn.one_hot(labels, C, dtype=jnp.float32)
    loss = jax.jit(posttrain_loss)(logits, gt_label, prob_dist,
                                   shrinkage_factor)
    jax.block_until_ready(loss)
    ref = _reference(logits, gt_label, prob_dist, shrinkage_factor)
    assert jnp.allclose(loss, ref, atol=1e-5, rtol=1e-5), (loss, ref)

    # ---- test 2: integer-label path, multi-tile grid + padded-row masking ---
    N2 = 20
    logits2 = jax.random.normal(k4, (N2, C), dtype=jnp.float32)
    labels2 = jax.random.randint(k5, (N2,), 0, C)
    gt2 = jax.nn.one_hot(labels2, C, dtype=jnp.float32)
    loss2 = posttrain_loss(logits2, labels2, prob_dist, shrinkage_factor)
    jax.block_until_ready(loss2)
    ref2 = _reference(logits2, gt2, prob_dist, shrinkage_factor)
    assert jnp.allclose(loss2, ref2, atol=1e-5, rtol=1e-5), (loss2, ref2)

    # ---- test 3: bf16 logits, one-hot path, multi-tile -----------------------
    logits3 = jax.random.normal(k6, (N2, C), dtype=jnp.float32).astype(jnp.bfloat16)
    labels3 = jax.random.randint(k7, (N2,), 0, C)
    gt3 = jax.nn.one_hot(labels3, C, dtype=jnp.float32)
    loss3 = posttrain_loss(logits3, gt3, prob_dist, shrinkage_factor)
    jax.block_until_ready(loss3)
    ref3 = _reference(logits3.astype(jnp.float32), gt3, prob_dist,
                      shrinkage_factor)
    assert jnp.allclose(loss3, ref3, atol=2e-5, rtol=2e-5), (loss3, ref3)

    print("KERNEL_OK")
</pallas_src>

<mosaic_0001>
module attributes {stable_mosaic.version = 11 : i64} {
  func.func @_posttrain_kernel_onehot(%arg0: i32, %arg1: memref<8x32xf32, #tpu.memory_space<vmem>>, %arg2: memref<8x32xf32, #tpu.memory_space<vmem>>, %arg3: memref<1x32xf32, #tpu.memory_space<vmem>>, %arg4: memref<1x8x128xf32, #tpu.memory_space<vmem>>) attributes {dimension_semantics = [#tpu.dimension_semantics<parallel>], iteration_bounds = array<i64: 1>, scalar_prefetch = 0 : i64, scratch_operands = 0 : i64, tpu.core_type = #tpu.core_type<tc>, window_params = [{transform_indices = @transform_0, window_bounds = array<i64: 8, 32>}, {transform_indices = @transform_1, window_bounds = array<i64: 8, 32>}, {pipeline_mode = #tpu.pipeline_mode<synchronous>, transform_indices = @transform_2, window_bounds = array<i64: 1, 32>}, {transform_indices = @transform_3, window_bounds = array<i64: 1, 8, 128>}]} {
    %c0 = arith.constant 0 : index
    %c0_0 = arith.constant 0 : index
    %0 = vector.load %arg1[%c0, %c0_0] : memref<8x32xf32, #tpu.memory_space<vmem>>, vector<8x32xf32>
    %c0_1 = arith.constant 0 : index
    %c0_2 = arith.constant 0 : index
    %1 = vector.load %arg2[%c0_1, %c0_2] : memref<8x32xf32, #tpu.memory_space<vmem>>, vector<8x32xf32>
    %c0_3 = arith.constant 0 : index
    %c0_4 = arith.constant 0 : index
    %2 = vector.load %arg3[%c0_3, %c0_4] : memref<1x32xf32, #tpu.memory_space<vmem>>, vector<1x32xf32>
    %c8_i32 = arith.constant 8 : i32
    %3 = arith.muli %arg0, %c8_i32 : i32
    %4 = tpu.iota {dimensions = array<i32: 0>} : vector<8x1xi32>
    %5 = vector.broadcast %3 : i32 to vector<8x1xi32>
    %6 = arith.addi %5, %4 : vector<8x1xi32>
    %c8_i32_5 = arith.constant 8 : i32
    %7 = vector.broadcast %c8_i32_5 : i32 to vector<8x1xi32>
    %8 = arith.cmpi slt, %6, %7 : vector<8x1xi32>
    %cst = arith.constant dense<0xFF800000> : vector<8xf32>
    %9 = vector.multi_reduction <maximumf>, %1, %cst [1] : vector<8x32xf32> to vector<8xf32>
    %10 = vector.shape_cast %9 : vector<8xf32> to vector<8x1xf32>
    %11 = vector.broadcast %10 : vector<8x1xf32> to vector<8x32xf32>
    %12 = arith.cmpf oeq, %1, %11 : vector<8x32xf32>
    %cst_6 = arith.constant 0.000000e+00 : f32
    %13 = vector.shape_cast %2 : vector<1x32xf32> to vector<1x32xf32>
    %14 = vector.broadcast %13 : vector<1x32xf32> to vector<8x32xf32>
    %15 = vector.broadcast %cst_6 : f32 to vector<8x32xf32>
    %16 = arith.select %12, %14, %15 : vector<8x32xi1>, vector<8x32xf32>
    %cst_7 = arith.constant dense<0.000000e+00> : vector<8xf32>
    %17 = vector.multi_reduction <add>, %16, %cst_7 [1] : vector<8x32xf32> to vector<8xf32>
    %18 = vector.shape_cast %17 : vector<8xf32> to vector<8x1xf32>
    %cst_8 = arith.constant dense<0xFF800000> : vector<8xf32>
    %19 = vector.multi_reduction <maximumf>, %0, %cst_8 [1] : vector<8x32xf32> to vector<8xf32>
    %20 = vector.shape_cast %19 : vector<8xf32> to vector<8x1xf32>
    %21 = vector.broadcast %20 : vector<8x1xf32> to vector<8x32xf32>
    %22 = arith.subf %0, %21 : vector<8x32xf32>
    %23 = math.exp %22 : vector<8x32xf32>
    %cst_9 = arith.constant dense<0.000000e+00> : vector<8xf32>
    %24 = vector.multi_reduction <add>, %23, %cst_9 [1] : vector<8x32xf32> to vector<8xf32>
    %25 = vector.shape_cast %24 : vector<8xf32> to vector<8x1xf32>
    %26 = math.log %25 : vector<8x1xf32>
    %cst_10 = arith.constant 0.000000e+00 : f32
    %27 = vector.broadcast %cst_10 : f32 to vector<8x32xf32>
    %28 = arith.select %12, %22, %27 : vector<8x32xi1>, vector<8x32xf32>
    %cst_11 = arith.constant dense<0.000000e+00> : vector<8xf32>
    %29 = vector.multi_reduction <add>, %28, %cst_11 [1] : vector<8x32xf32> to vector<8xf32>
    %30 = vector.shape_cast %29 : vector<8xf32> to vector<8x1xf32>
    %31 = arith.subf %30, %26 : vector<8x1xf32>
    %32 = math.exp %31 : vector<8x1xf32>
    %cst_12 = arith.constant 1.000000e+00 : f32
    %33 = vector.broadcast %cst_12 : f32 to vector<8x1xf32>
    %34 = arith.subf %33, %32 : vector<8x1xf32>
    %35 = arith.mulf %34, %34 : vector<8x1xf32>
    %cst_13 = arith.constant 0.000000e+00 : f32
    %36 = vector.broadcast %cst_13 : f32 to vector<8x1xf32>
    %37 = arith.subf %36, %35 : vector<8x1xf32>
    %38 = arith.mulf %31, %18 : vector<8x1xf32>
    %39 = arith.mulf %37, %38 : vector<8x1xf32>
    %cst_14 = arith.constant 0.000000e+00 : f32
    %40 = vector.broadcast %cst_14 : f32 to vector<8x1xf32>
    %41 = arith.select %8, %39, %40 : vector<8x1xi1>, vector<8x1xf32>
    %cst_15 = arith.constant 1.000000e+00 : f32
    %42 = vector.broadcast %cst_15 : f32 to vector<8x1xf32>
    %43 = arith.divf %42, %25 : vector<8x1xf32>
    %cst_16 = arith.constant 0.000000e+00 : f32
    %44 = vector.broadcast %cst_16 : f32 to vector<8x1xf32>
    %45 = arith.cmpf oeq, %30, %44 : vector<8x1xf32>
    %cst_17 = arith.constant 0.000000e+00 : f32
    %46 = vector.broadcast %cst_17 : f32 to vector<8x32xf32>
    %47 = arith.cmpf oeq, %22, %46 : vector<8x32xf32>
    %cst_18 = arith.constant 0.000000e+00 : f32
    %48 = vector.broadcast %cst_18 : f32 to vector<8x32xf32>
    %49 = arith.select %47, %48, %23 : vector<8x32xi1>, vector<8x32xf32>
    %cst_19 = arith.constant dense<0xFF800000> : vector<8xf32>
    %50 = vector.multi_reduction <maximumf>, %49, %cst_19 [1] : vector<8x32xf32> to vector<8xf32>
    %51 = vector.shape_cast %50 : vector<8xf32> to vector<8x1xf32>
    %52 = arith.mulf %51, %43 : vector<8x1xf32>
    %cst_20 = arith.constant 1.000000e+00 : f32
    %53 = vector.broadcast %cst_20 : f32 to vector<8x1xf32>
    %54 = arith.subf %53, %43 : vector<8x1xf32>
    %55 = arith.addf %54, %52 : vector<8x1xf32>
    %56 = arith.subf %43, %52 : vector<8x1xf32>
    %57 = arith.select %45, %55, %56 : vector<8x1xi1>, vector<8x1xf32>
    %cst_21 = arith.constant 0.000000e+00 : f32
    %58 = vector.broadcast %cst_21 : f32 to vector<8x1xf32>
    %59 = arith.select %8, %57, %58 : vector<8x1xi1>, vector<8x1xf32>
    %60 = vector.shape_cast %41 : vector<8x1xf32> to vector<1x8x1xf32>
    %cst_22 = arith.constant dense<0.000000e+00> : vector<1xf32>
    %61 = vector.multi_reduction <add>, %60, %cst_22 [1, 2] : vector<1x8x1xf32> to vector<1xf32>
    %62 = vector.shape_cast %61 : vector<1xf32> to vector<1x1x1xf32>
    %63 = vector.extract %62[0, 0, 0] : f32 from vector<1x1x1xf32>
    %64 = vector.shape_cast %59 : vector<8x1xf32> to vector<1x8x1xf32>
    %cst_23 = arith.constant dense<0.000000e+00> : vector<1xf32>
    %65 = vector.multi_reduction <add>, %64, %cst_23 [1, 2] : vector<1x8x1xf32> to vector<1xf32>
    %66 = vector.shape_cast %65 : vector<1xf32> to vector<1x1x1xf32>
    %67 = vector.extract %66[0, 0, 0] : f32 from vector<1x1x1xf32>
    %68 = tpu.iota {dimensions = array<i32: 2>} : vector<1x8x128xi32>
    %c0_i32 = arith.constant 0 : i32
    %69 = vector.broadcast %c0_i32 : i32 to vector<1x8x128xi32>
    %70 = arith.cmpi eq, %68, %69 : vector<1x8x128xi32>
    %c1_i32 = arith.constant 1 : i32
    %71 = vector.broadcast %c1_i32 : i32 to vector<1x8x128xi32>
    %72 = arith.cmpi eq, %68, %71 : vector<1x8x128xi32>
    %cst_24 = arith.constant 0.000000e+00 : f32
    %73 = vector.broadcast %67 : f32 to vector<1x8x128xf32>
    %74 = vector.broadcast %cst_24 : f32 to vector<1x8x128xf32>
    %75 = arith.select %72, %73, %74 : vector<1x8x128xi1>, vector<1x8x128xf32>
    %76 = vector.broadcast %63 : f32 to vector<1x8x128xf32>
    %77 = arith.select %70, %76, %75 : vector<1x8x128xi1>, vector<1x8x128xf32>
    %c0_25 = arith.constant 0 : index
    %c0_26 = arith.constant 0 : index
    %c0_27 = arith.constant 0 : index
    %78 = vector.load %arg4[%c0_25, %c0_26, %c0_27] : memref<1x8x128xf32, #tpu.memory_space<vmem>>, vector<1x8x128xf32>
    tpu.vector_store %arg4[%c0_25, %c0_26, %c0_27], %77 {strides = array<i32>} : memref<1x8x128xf32, #tpu.memory_space<vmem>>, vector<1x8x128xf32>,
    return
  }
  func.func @transform_0(%arg0: i32) -> (i32, i32) {
    %c0_i32 = arith.constant 0 : i32
    %c0_i32_0 = arith.constant 0 : i32
    return %arg0, %c0_i32 : i32, i32
  }
  func.func @transform_1(%arg0: i32) -> (i32, i32) {
    %c0_i32 = arith.constant 0 : i32
    %c0_i32_0 = arith.constant 0 : i32
    return %arg0, %c0_i32 : i32, i32
  }
  func.func @transform_2(%arg0: i32) -> (i32, i32) {
    %c0_i32 = arith.constant 0 : i32
    %c0_i32_0 = arith.constant 0 : i32
    %c0_i32_1 = arith.constant 0 : i32
    return %c0_i32, %c0_i32_0 : i32, i32
  }
  func.func @transform_3(%arg0: i32) -> (i32, i32, i32) {
    %c0_i32 = arith.constant 0 : i32
    %c0_i32_0 = arith.constant 0 : i32
    %c0_i32_1 = arith.constant 0 : i32
    return %arg0, %c0_i32, %c0_i32_0 : i32, i32, i32
  }
}

</mosaic_0001>

<llo_original>
// kernel: posttrain_loss.1
$region0: #{posttrain_loss.1}
  #allocation0 [shape = 'u32[]', space=smem, size = 0x4, offset = 0x4, fixed_abs, tag = 'smem constant byte address 0x4 - core index']
  #allocation1 [shape = 'u32[144,128]{1,0:T(1,128)}', space=vmem, size = 0x12000, scoped, tag = 'internal scratch']
  %s0 = inlined_call_operand.vmem [shape: f32[8,32], index: 0, kind: input, shape index: {}]
  %s1 = inlined_call_operand.hbm [shape: f32[8,32], index: 1, kind: input, shape index: {}]
  %s2 = inlined_call_operand.vmem [shape: f32[1,32], index: 2, kind: input, shape index: {}]
  %s3 = inlined_call_operand.vmem [shape: f32[1,8,128], index: 3, kind: output, shape index: {}]
  %s4 = sld [smem:[#allocation0]]
  $region26: #{posttrain_loss.1} parent=0
    _
  %s6 = ssub.s32 1, %s4
  %s7 = scalar_select 0, %s6, %s4
  $region1: #{posttrain_loss.1} parent=0
    #allocation2 [shape = 'u8[4096]{0}', space=vmem, size = 0x1000, scoped, tag = 'input window, operand 1, single buffered']
    #allocation3 [shape = 's32[1]{0}', space=sflag, size = 0x4, scoped, tag = 'scoped memory for posttrain_loss.1']
    %8 = vsyncpa [#allocation3], 0
    // Predicated region
    $region2: #{posttrain_loss.1} parent=1 // pred_check
      _
    $region3: #{posttrain_loss.1} parent=1 // pred_check_branch
      %10 = sbr.rel (0) target = $region5
    $region4: #{posttrain_loss.1} parent=1 // pred_region
      _
    $region5: #{posttrain_loss.1} parent=1 // pred_fallthru
      _
    // Predicated region
    $region6: #{posttrain_loss.1} parent=1 // pred_check
      _
    $region7: #{posttrain_loss.1} parent=1 // pred_check_branch
      %12 = sbr.rel (0) target = $region9
    $region8: #{posttrain_loss.1} parent=1 // pred_region
      %s14 = ssub.s32 128, 128
      %15 = vsyncadd [#allocation3], %s14
      %s17 = sshll.u32 [#allocation2], 4
      %s18 = int_to_ptr.vmem [resolvable:$true] %s17
      %20 = dma.hbm_to_vmem [thread:$0]  %s1, 128, %s18, [#allocation3]
    $region9: #{posttrain_loss.1} parent=1 // pred_fallthru
      _
    // Predicated region
    $region10: #{posttrain_loss.1} parent=1 // pred_check
      _
    $region11: #{posttrain_loss.1} parent=1 // pred_check_branch
      %22 = sbr.rel (0) target = $region13
    $region12: #{posttrain_loss.1} parent=1 // pred_region
      _
    $region13: #{posttrain_loss.1} parent=1 // pred_fallthru
      _
    // Predicated region
    $region14: #{posttrain_loss.1} parent=1 // pred_check
      _
    $region15: #{posttrain_loss.1} parent=1 // pred_check_branch
      %24 = sbr.rel (0) target = $region17
    $region16: #{posttrain_loss.1} parent=1 // pred_region
      %25 = dma.done [#allocation3], 128
    $region17: #{posttrain_loss.1} parent=1 // pred_fallthru
      _
    %v26 = vld [vmem:[%s0] sm:$0xff]
    %v27 = vld [vmem:[#allocation2] sm:$0xff]
    %v28 = vld [vmem:[%s2] sm:$0x1]
    %s29 = smul.u32 0, 8
    %v30 = vlaneseq
    %v31 = vshrl.u32 %v30, 7
    %v32 = vstv %s29
    %v33 = vadd.s32 %v32, %v31
    %vm34 = vcmp.lt.s32.totalorder %v33, 8
    %vm35 = vcmask 261120
    %v36 = vsel %vm35, %v27, -inf
    %37 = vmax.xlane.f32.xlu0 %v36
    %v38 = vpop.xlane.xlu0 %37
    %vm39 = vcmp.eq.f32.partialorder %v27, %v38
    %v41 = vlaneseq
    %v42 = vshrl.u32 %v41, 7
    %v43 = vsub.s32 0, %v42
    %v44 = vrot.slane %v28, %v43
    %v46 = vsel %vm39, %v44, 0.0
    %v47 = vsel %vm35, %v46, 0.0
    %48 = vadd.xlane.f32.xlu0 %v47
    %v49 = vpop.xlane.xlu0 %48
    %v50 = vsel %vm35, %v26, -inf
    %51 = vmax.xlane.f32.xlu0 %v50
    %v52 = vpop.xlane.xlu0 %51
    %v53 = vsub.f32 %v26, %v52
    %v54 = vmul.f32 %v53, 1.442695
    %v55 = vpow.pop %v54
    %v56 = vsel %vm35, %v55, 0.0
    %57 = vadd.xlane.f32.xlu0 %v56
    %v58 = vpop.xlane.xlu0 %57
    %v59 = vlog2.pop %v58
    %v60 = vmul.f32 %v59, 0.6931472
    %v61 = vsel %vm39, %v53, 0.0
    %v62 = vsel %vm35, %v61, 0.0
    %63 = vadd.xlane.f32.xlu0 %v62
    %v64 = vpop.xlane.xlu0 %63
    %v65 = vsub.f32 %v64, %v60
    %v66 = vmul.f32 %v65, 1.442695
    %v67 = vpow.pop %v66
    %v68 = vsub.f32 1.0, %v67
    %v69 = vmul.f32 %v68, %v68
    %v70 = vsub.f32 0.0, %v69
    %v71 = vmul.f32 %v65, %v49
    %v72 = vmul.f32 %v70, %v71
    %v73 = vsel %vm34, %v72, 0.0
    %v74 = vrcp.pop %v58
    %v75 = vmul.f32 1.0, %v74
    %vm76 = vcmp.eq.f32.partialorder %v64, 0.0
    %vm77 = vcmp.eq.f32.partialorder %v53, 0.0
    %v78 = vsel %vm77, 0.0, %v55
    %v79 = vsel %vm35, %v78, -inf
    %80 = vmax.xlane.f32.xlu0 %v79
    %v81 = vpop.xlane.xlu0 %80
    %v82 = vmul.f32 %v81, %v75
    %v83 = vsub.f32 1.0, %v75
    %v84 = vadd.f32 %v83, %v82
    %v85 = vsub.f32 %v75, %v82
    %v86 = vsel %vm76, %v84, %v85
    %v87 = vsel %vm34, %v86, 0.0
    %vm88 = vcmask 7168
    %v89 = vsel %vm88, %v73, 0.0
    %90 = vadd.xlane.f32.xlu0 %v89
    %v91 = vpop.xlane.xlu0 %90
    %v92 = vrot.slane %v91, 4
    %v93 = vadd.f32 %v91, %v92
    %v94 = vrot.slane %v93, 2
    %v95 = vadd.f32 %v93, %v94
    %v96 = vrot.slane %v95, 1
    %v97 = vadd.f32 %v95, %v96
    %s98 = vtos %v97
    %v99 = vsel %vm88, %v87, 0.0
    %100 = vadd.xlane.f32.xlu0 %v99
    %v101 = vpop.xlane.xlu0 %100
    %v102 = vrot.slane %v101, 4
    %v103 = vadd.f32 %v101, %v102
    %v104 = vrot.slane %v103, 2
    %v105 = vadd.f32 %v103, %v104
    %v106 = vrot.slane %v105, 1
    %v107 = vadd.f32 %v105, %v106
    %s108 = vtos %v107
    %v109 = vlaneseq
    %v110 = vand.u32 %v109, 127
    %vm111 = vcmp.eq.s32.totalorder %v110, 0
    %vm112 = vcmp.eq.s32.totalorder %v110, 1
    %v113 = vstv %s108
    %v114 = vsel %vm112, %v113, 0.0
    %v115 = vstv %s98
    %v116 = vsel %vm111, %v115, %v114
    %117 = vst [vmem:[%s3] sm:$0xff] %v116
    // Predicated region
    $region18: #{posttrain_loss.1} parent=1 // pred_check
      _
    $region19: #{posttrain_loss.1} parent=1 // pred_check_branch
      %119 = sbr.rel (0) target = $region21
    $region20: #{posttrain_loss.1} parent=1 // pred_region
      _
    $region21: #{posttrain_loss.1} parent=1 // pred_fallthru
      _
    // Predicated region
    $region22: #{posttrain_loss.1} parent=1 // pred_check
      _
    $region23: #{posttrain_loss.1} parent=1 // pred_check_branch
      %121 = sbr.rel (0) target = $region25
    $region24: #{posttrain_loss.1} parent=1 // pred_region
      _
    $region25: #{posttrain_loss.1} parent=1 // pred_fallthru
      _
    %122 = vsyncpa [#allocation3], 1

</llo_original>
